<compile_context>
chip_gen: v6e
topology: v6e:2x2x1
jax: 0.10.0
libtpu: 0.0.40
codegen_flags: <defaults>
</compile_context>

<pallas_src>
import functools

import jax
import jax.numpy as jnp
from jax.experimental import pallas as pl
from jax.experimental.pallas import tpu as pltpu


def _round_up(v, m):
    return (v + m - 1) // m * m


# ---------------------------------------------------------------------------
# Fused kernel: one row tile per grid step.
#   feat = l2norm(x) @ W + b ; optional l2norm(feat) ; optional abs(feat)
# l2norm folds into a per-row rsqrt applied AFTER the matmul:
#   (x / ||x||) @ W == (x @ W) * rsqrt(sum(x^2))
# ---------------------------------------------------------------------------
def _encoder_kernel(x_ref, w_ref, b_ref, o_ref, *, no_imgnorm, use_abs, eps):
    x = x_ref[...]                                        # (tm, D) f32
    ssq = jnp.sum(x * x, axis=1, keepdims=True)           # XLU reduce, (tm, 1)
    inv_in = jax.lax.rsqrt(ssq + eps)                     # EUP slot

    # W is streamed from HBM as bf16 (pre-converted once at init); upcast in
    # VMEM so the activations stay full f32 (matches a W-only-quantized ref).
    h = jnp.dot(x, w_ref[...].astype(jnp.float32),
                preferred_element_type=jnp.float32)       # (tm, E) MXU

    feat = h * inv_in + b_ref[...]                        # fc output
    if not no_imgnorm:
        inv_out = jax.lax.rsqrt(
            jnp.sum(feat * feat, axis=1, keepdims=True) + eps)
        feat = feat * inv_out
    if use_abs:
        feat = jnp.abs(feat)
    o_ref[...] = feat


# ---------------------------------------------------------------------------
# Parameter prep (done ONCE, hoisted out of the per-call path)
# ---------------------------------------------------------------------------
def prepare_params(w, b):
    """w: (img_dim, embed) f32 (transposed PyTorch fc.weight), b: (embed,).
    Returns bf16 weights and a (1, embed) f32 bias row for the kernel."""
    return w.astype(jnp.bfloat16), b.astype(jnp.float32).reshape(1, -1)


# ---------------------------------------------------------------------------
# Forward wrapper
# ---------------------------------------------------------------------------
_VMEM_PIPELINE_BUDGET = 20 * 1024 * 1024   # headroom below the 32 MiB limit


@functools.partial(jax.jit, static_argnames=("no_imgnorm", "use_abs", "tm"))
def encoder_image_forward(images, w_bf16, b_row, *, no_imgnorm=False,
                          use_abs=False, tm=512):
    """EncoderImagePrecomp forward.

    images: (B, ...) any trailing dims (flattened like images.view(B, -1))
    w_bf16: (img_dim, embed) bf16 (from prepare_params)
    b_row:  (1, embed) f32   (from prepare_params)
    returns (B, embed) float32
    """
    B = images.shape[0]
    x = images.reshape(B, -1).astype(jnp.float32)   # no big padding copies
    D = x.shape[1]
    E = w_bf16.shape[1]

    # Tiny-batch case: pad rows up to 8 (negligible copy) so all blocks keep
    # sublane-aligned row dims.  For B >= 8 there is NO padding: the ragged
    # edge is a masked boundary block (garbage rows are per-row-independent
    # and never stored).
    if B < 8:
        x = jnp.pad(x, ((0, 8 - B), (0, 0)))
        Bp = 8
    else:
        Bp = B

    # Row-tile selection from a VMEM budget: double-buffered x tile + resident
    # bf16 W + double-buffered output tile must fit comfortably on every gen
    # (v7x has only 64 MiB physical VMEM).
    w_bytes = 2 * D * E * 2                  # bf16 W, 2 pipeline buffers
    per_row = 2 * D * 4 + 2 * E * 4          # x + out, double-buffered, f32
    tm_cap = max(8, (_VMEM_PIPELINE_BUDGET - w_bytes) // per_row)
    # TODO(synk): for img_dim so large that 8 rows (or W itself) overflow VMEM,
    # a K-tiled accumulator variant would be needed; not required for ~2048.
    tm_eff = max(8, (min(tm, tm_cap) // 8) * 8)
    # Keep >= 2 row tiles when possible so the "parallel" axis can span both
    # v7x TensorCores.
    half = _round_up(-(-Bp // 2), 8)
    tm_eff = min(tm_eff, half)
    grid = (pl.cdiv(Bp, tm_eff),)

    kernel = functools.partial(_encoder_kernel, no_imgnorm=no_imgnorm,
                               use_abs=use_abs, eps=1e-12)

    cost = pl.CostEstimate(
        flops=2 * B * D * E,
        transcendentals=2 * B,
        bytes_accessed=B * D * 4 + D * E * 2 + E * 4 + B * E * 4)

    out = pl.pallas_call(
        kernel,
        out_shape=jax.ShapeDtypeStruct((Bp, E), jnp.float32),
        grid=grid,
        in_specs=[
            pl.BlockSpec((tm_eff, D), lambda i: (i, 0)),   # x row tile, full D
            pl.BlockSpec((D, E), lambda i: (0, 0)),        # W resident, bf16
            pl.BlockSpec((1, E), lambda i: (0, 0)),        # bias row
        ],
        out_specs=pl.BlockSpec((tm_eff, E), lambda i: (i, 0)),
        compiler_params=pltpu.CompilerParams(
            dimension_semantics=("parallel",),
            vmem_limit_bytes=32 * 1024 * 1024),
        cost_estimate=cost,
    )(x, w_bf16, b_row)

    return out[:B] if Bp != B else out


# ---------------------------------------------------------------------------
# Deterministic parameter init (Xavier uniform, like init_weights)
# ---------------------------------------------------------------------------
def init_params(key, img_dim, embed_size):
    r = jnp.sqrt(6.0) / jnp.sqrt(img_dim + embed_size)
    # stored as (in, out) == transposed PyTorch nn.Linear weight
    w = jax.random.uniform(key, (img_dim, embed_size), jnp.float32,
                           minval=-r, maxval=r)
    b = jnp.zeros((embed_size,), jnp.float32)
    return w, b


def reference_forward(images, w, b, *, no_imgnorm=False, use_abs=False):
    x = images.reshape(images.shape[0], -1).astype(jnp.float32)
    x = x / jnp.sqrt(jnp.sum(x * x, axis=1, keepdims=True))
    feat = x @ w + b
    if not no_imgnorm:
        feat = feat / jnp.sqrt(jnp.sum(feat * feat, axis=1, keepdims=True))
    if use_abs:
        feat = jnp.abs(feat)
    return feat


if __name__ == "__main__":
    key = jax.random.PRNGKey(0)
    k_img, k_par = jax.random.split(key)

    # Small shapes consistent with the module (img_dim scaled down from 2048;
    # embed_size=51 is the module default and exercises lane-masked stores).
    B, C, H, W = 2, 4, 16, 16          # flattened img_dim = 1024
    EMBED = 51

    images = jax.random.normal(k_img, (B, C, H, W), jnp.float32)
    w, b = init_params(k_par, C * H * W, EMBED)
    w_bf16, b_row = prepare_params(w, b)        # one-time param prep

    out = encoder_image_forward(images, w_bf16, b_row)
    out = jax.block_until_ready(out)

    # Fair reference: same (W-only) bf16 quantization the kernel applies;
    # activations stay f32 in both paths.
    w_q = w_bf16.astype(jnp.float32)
    ref = reference_forward(images, w_q, b)

    assert out.shape == (B, EMBED)
    assert jnp.allclose(out, ref, atol=1e-2, rtol=1e-2), "mismatch vs reference"

    print("KERNEL_OK")
</pallas_src>

<mosaic_0001>
module attributes {stable_mosaic.version = 11 : i64} {
  func.func @_encoder_kernel(%arg0: i32, %arg1: memref<8x1024xf32, #tpu.memory_space<vmem>>, %arg2: memref<1024x51xbf16, #tpu.memory_space<vmem>>, %arg3: memref<1x51xf32, #tpu.memory_space<vmem>>, %arg4: memref<8x51xf32, #tpu.memory_space<vmem>>) attributes {dimension_semantics = [#tpu.dimension_semantics<parallel>], iteration_bounds = array<i64: 1>, scalar_prefetch = 0 : i64, scratch_operands = 0 : i64, tpu.core_type = #tpu.core_type<tc>, window_params = [{transform_indices = @transform_0, window_bounds = array<i64: 8, 1024>}, {pipeline_mode = #tpu.pipeline_mode<synchronous>, transform_indices = @transform_1, window_bounds = array<i64: 1024, 51>}, {pipeline_mode = #tpu.pipeline_mode<synchronous>, transform_indices = @transform_2, window_bounds = array<i64: 1, 51>}, {transform_indices = @transform_3, window_bounds = array<i64: 8, 51>}]} {
    %c0 = arith.constant 0 : index
    %c0_0 = arith.constant 0 : index
    %0 = vector.load %arg1[%c0, %c0_0] : memref<8x1024xf32, #tpu.memory_space<vmem>>, vector<8x1024xf32>
    %1 = arith.mulf %0, %0 : vector<8x1024xf32>
    %cst = arith.constant dense<0.000000e+00> : vector<8xf32>
    %2 = vector.multi_reduction <add>, %1, %cst [1] : vector<8x1024xf32> to vector<8xf32>
    %3 = vector.shape_cast %2 : vector<8xf32> to vector<8x1xf32>
    %cst_1 = arith.constant 9.99999996E-13 : f32
    %4 = vector.broadcast %cst_1 : f32 to vector<8x1xf32>
    %5 = arith.addf %3, %4 : vector<8x1xf32>
    %6 = math.rsqrt %5 : vector<8x1xf32>
    %c0_2 = arith.constant 0 : index
    %c0_3 = arith.constant 0 : index
    %7 = vector.load %arg2[%c0_2, %c0_3] : memref<1024x51xbf16, #tpu.memory_space<vmem>>, vector<1024x51xbf16>
    %8 = arith.extf %7 : vector<1024x51xbf16> to vector<1024x51xf32>
    %cst_4 = arith.constant dense<0.000000e+00> : vector<8x51xf32>
    %9 = tpu.matmul %0, %8, %cst_4 {dimension_numbers = #tpu.dot_dimension_numbers<[1], [0], [0], [1], [0, 0, 1, 1], [], []>} : vector<8x1024xf32>, vector<1024x51xf32>, vector<8x51xf32> -> vector<8x51xf32>
    %10 = vector.broadcast %6 : vector<8x1xf32> to vector<8x51xf32>
    %11 = arith.mulf %9, %10 : vector<8x51xf32>
    %c0_5 = arith.constant 0 : index
    %c0_6 = arith.constant 0 : index
    %12 = vector.load %arg3[%c0_5, %c0_6] : memref<1x51xf32, #tpu.memory_space<vmem>>, vector<1x51xf32>
    %13 = vector.broadcast %12 : vector<1x51xf32> to vector<8x51xf32>
    %14 = arith.addf %11, %13 : vector<8x51xf32>
    %15 = arith.mulf %14, %14 : vector<8x51xf32>
    %cst_7 = arith.constant dense<0.000000e+00> : vector<8xf32>
    %16 = vector.multi_reduction <add>, %15, %cst_7 [1] : vector<8x51xf32> to vector<8xf32>
    %17 = vector.shape_cast %16 : vector<8xf32> to vector<8x1xf32>
    %cst_8 = arith.constant 9.99999996E-13 : f32
    %18 = vector.broadcast %cst_8 : f32 to vector<8x1xf32>
    %19 = arith.addf %17, %18 : vector<8x1xf32>
    %20 = math.rsqrt %19 : vector<8x1xf32>
    %21 = vector.broadcast %20 : vector<8x1xf32> to vector<8x51xf32>
    %22 = arith.mulf %14, %21 : vector<8x51xf32>
    %c0_9 = arith.constant 0 : index
    %c0_10 = arith.constant 0 : index
    %23 = vector.load %arg4[%c0_9, %c0_10] : memref<8x51xf32, #tpu.memory_space<vmem>>, vector<8x51xf32>
    tpu.vector_store %arg4[%c0_9, %c0_10], %22 {strides = array<i32>} : memref<8x51xf32, #tpu.memory_space<vmem>>, vector<8x51xf32>,
    return
  }
  func.func @transform_0(%arg0: i32) -> (i32, i32) {
    %c0_i32 = arith.constant 0 : i32
    %c0_i32_0 = arith.constant 0 : i32
    return %arg0, %c0_i32 : i32, i32
  }
  func.func @transform_1(%arg0: i32) -> (i32, i32) {
    %c0_i32 = arith.constant 0 : i32
    %c0_i32_0 = arith.constant 0 : i32
    %c0_i32_1 = arith.constant 0 : i32
    return %c0_i32, %c0_i32_0 : i32, i32
  }
  func.func @transform_2(%arg0: i32) -> (i32, i32) {
    %c0_i32 = arith.constant 0 : i32
    %c0_i32_0 = arith.constant 0 : i32
    %c0_i32_1 = arith.constant 0 : i32
    return %c0_i32, %c0_i32_0 : i32, i32
  }
  func.func @transform_3(%arg0: i32) -> (i32, i32) {
    %c0_i32 = arith.constant 0 : i32
    %c0_i32_0 = arith.constant 0 : i32
    return %arg0, %c0_i32 : i32, i32
  }
}

</mosaic_0001>

<llo_original>
// kernel: encoder_image_forward.1
$region0: #{encoder_image_forward.1}
  #allocation0 [shape = 'u32[]', space=smem, size = 0x4, offset = 0x4, fixed_abs, tag = 'smem constant byte address 0x4 - core index']
  #allocation1 [shape = 'u32[144,128]{1,0:T(1,128)}', space=vmem, size = 0x12000, scoped, tag = 'internal scratch']
  %s0 = inlined_call_operand.vmem [shape: f32[8,1024], index: 0, kind: input, shape index: {}]
  %s1 = inlined_call_operand.vmem [shape: bf16[1024,51], index: 1, kind: input, shape index: {}]
  %s2 = inlined_call_operand.vmem [shape: f32[1,51], index: 2, kind: input, shape index: {}]
  %s3 = inlined_call_operand.vmem [shape: f32[8,51], index: 3, kind: output, shape index: {}]
  %s4 = sld [smem:[#allocation0]]
  $region22: #{encoder_image_forward.1} parent=0
    _
  %s6 = ssub.s32 1, %s4
  %s7 = scalar_select 0, %s6, %s4
  // Predicated region
  $region2: #{encoder_image_forward.1} parent=0 // pred_check
    _
  $region3: #{encoder_image_forward.1} parent=0 // pred_check_branch
    %9 = sbr.rel (0) target = $region5
  $region4: #{encoder_image_forward.1} parent=0 // pred_region
    _
  $region5: #{encoder_image_forward.1} parent=0 // pred_fallthru
    _
  // Predicated region
  $region6: #{encoder_image_forward.1} parent=0 // pred_check
    _
  $region7: #{encoder_image_forward.1} parent=0 // pred_check_branch
    %11 = sbr.rel (0) target = $region9
  $region8: #{encoder_image_forward.1} parent=0 // pred_region
    _
  $region9: #{encoder_image_forward.1} parent=0 // pred_fallthru
    _
  // Predicated region
  $region10: #{encoder_image_forward.1} parent=0 // pred_check
    _
  $region11: #{encoder_image_forward.1} parent=0 // pred_check_branch
    %13 = sbr.rel (0) target = $region13
  $region12: #{encoder_image_forward.1} parent=0 // pred_region
    _
  $region13: #{encoder_image_forward.1} parent=0 // pred_fallthru
    _
  %v14 = vld [vmem:[%s0] sm:$0xff]
  %v15 = vld [vmem:[%s0 + $0x8] sm:$0xff]
  %v16 = vld [vmem:[%s0 + $0x10] sm:$0xff]
  %v17 = vld [vmem:[%s0 + $0x18] sm:$0xff]
  %v18 = vld [vmem:[%s0 + $0x20] sm:$0xff]
  %v19 = vld [vmem:[%s0 + $0x28] sm:$0xff]
  %v20 = vld [vmem:[%s0 + $0x30] sm:$0xff]
  %v21 = vld [vmem:[%s0 + $0x38] sm:$0xff]
  %v22 = vmul.f32 %v14, %v14
  %v23 = vmul.f32 %v15, %v15
  %v24 = vmul.f32 %v16, %v16
  %v25 = vmul.f32 %v17, %v17
  %v26 = vmul.f32 %v18, %v18
  %v27 = vmul.f32 %v19, %v19
  %v28 = vmul.f32 %v20, %v20
  %v29 = vmul.f32 %v21, %v21
  %v30 = vadd.f32 %v22, %v23
  %v31 = vadd.f32 %v30, %v24
  %v32 = vadd.f32 %v31, %v25
  %v33 = vadd.f32 %v32, %v26
  %v34 = vadd.f32 %v33, %v27
  %v35 = vadd.f32 %v34, %v28
  %v36 = vadd.f32 %v35, %v29
  %37 = vadd.xlane.f32.xlu0 %v36
  %v38 = vpop.xlane.xlu0 %37
  %v39 = vadd.f32 %v38, 1e-12
  %v40 = vrsqrt.pop %v39
  %v41 = vld [vmem:[%s1] sm:$0xf]
  %v42 = vld [vmem:[%s1 + $0x4] sm:$0xf]
  %v43 = vld [vmem:[%s1 + $0x8] sm:$0xf]
  %v44 = vld [vmem:[%s1 + $0xc] sm:$0xf]
  %v45 = vld [vmem:[%s1 + $0x10] sm:$0xf]
  %v46 = vld [vmem:[%s1 + $0x14] sm:$0xf]
  %v47 = vld [vmem:[%s1 + $0x18] sm:$0xf]
  %v48 = vld [vmem:[%s1 + $0x1c] sm:$0xf]
  %v49 = vld [vmem:[%s1 + $0x20] sm:$0xf]
  %v50 = vld [vmem:[%s1 + $0x24] sm:$0xf]
  %v51 = vld [vmem:[%s1 + $0x28] sm:$0xf]
  %v52 = vld [vmem:[%s1 + $0x2c] sm:$0xf]
  %v53 = vld [vmem:[%s1 + $0x30] sm:$0xf]
  %v54 = vld [vmem:[%s1 + $0x34] sm:$0xf]
  %v55 = vld [vmem:[%s1 + $0x38] sm:$0xf]
  %v56 = vld [vmem:[%s1 + $0x3c] sm:$0xf]
  %v57 = vld [vmem:[%s1 + $0x40] sm:$0xf]
  %v58 = vld [vmem:[%s1 + $0x44] sm:$0xf]
  %v59 = vld [vmem:[%s1 + $0x48] sm:$0xf]
  %v60 = vld [vmem:[%s1 + $0x4c] sm:$0xf]
  %v61 = vld [vmem:[%s1 + $0x50] sm:$0xf]
  %v62 = vld [vmem:[%s1 + $0x54] sm:$0xf]
  %v63 = vld [vmem:[%s1 + $0x58] sm:$0xf]
  %v64 = vld [vmem:[%s1 + $0x5c] sm:$0xf]
  %v65 = vld [vmem:[%s1 + $0x60] sm:$0xf]
  %v66 = vld [vmem:[%s1 + $0x64] sm:$0xf]
  %v67 = vld [vmem:[%s1 + $0x68] sm:$0xf]
  %v68 = vld [vmem:[%s1 + $0x6c] sm:$0xf]
  %v69 = vld [vmem:[%s1 + $0x70] sm:$0xf]
  %v70 = vld [vmem:[%s1 + $0x74] sm:$0xf]
  %v71 = vld [vmem:[%s1 + $0x78] sm:$0xf]
  %v72 = vld [vmem:[%s1 + $0x7c] sm:$0xf]
  %v73 = vld [vmem:[%s1 + $0x80] sm:$0xf]
  %v74 = vld [vmem:[%s1 + $0x84] sm:$0xf]
  %v75 = vld [vmem:[%s1 + $0x88] sm:$0xf]
  %v76 = vld [vmem:[%s1 + $0x8c] sm:$0xf]
  %v77 = vld [vmem:[%s1 + $0x90] sm:$0xf]
  %v78 = vld [vmem:[%s1 + $0x94] sm:$0xf]
  %v79 = vld [vmem:[%s1 + $0x98] sm:$0xf]
  %v80 = vld [vmem:[%s1 + $0x9c] sm:$0xf]
  %v81 = vld [vmem:[%s1 + $0xa0] sm:$0xf]
  %v82 = vld [vmem:[%s1 + $0xa4] sm:$0xf]
  %v83 = vld [vmem:[%s1 + $0xa8] sm:$0xf]
  %v84 = vld [vmem:[%s1 + $0xac] sm:$0xf]
  %v85 = vld [vmem:[%s1 + $0xb0] sm:$0xf]
  %v86 = vld [vmem:[%s1 + $0xb4] sm:$0xf]
  %v87 = vld [vmem:[%s1 + $0xb8] sm:$0xf]
  %v88 = vld [vmem:[%s1 + $0xbc] sm:$0xf]
  %v89 = vld [vmem:[%s1 + $0xc0] sm:$0xf]
  %v90 = vld [vmem:[%s1 + $0xc4] sm:$0xf]
  %v91 = vld [vmem:[%s1 + $0xc8] sm:$0xf]
  %v92 = vld [vmem:[%s1 + $0xcc] sm:$0xf]
  %v93 = vld [vmem:[%s1 + $0xd0] sm:$0xf]
  %v94 = vld [vmem:[%s1 + $0xd4] sm:$0xf]
  %v95 = vld [vmem:[%s1 + $0xd8] sm:$0xf]
  %v96 = vld [vmem:[%s1 + $0xdc] sm:$0xf]
  %v97 = vld [vmem:[%s1 + $0xe0] sm:$0xf]
  %v98 = vld [vmem:[%s1 + $0xe4] sm:$0xf]
  %v99 = vld [vmem:[%s1 + $0xe8] sm:$0xf]
  %v100 = vld [vmem:[%s1 + $0xec] sm:$0xf]
  %v101 = vld [vmem:[%s1 + $0xf0] sm:$0xf]
  %v102 = vld [vmem:[%s1 + $0xf4] sm:$0xf]
  %v103 = vld [vmem:[%s1 + $0xf8] sm:$0xf]
  %v104 = vld [vmem:[%s1 + $0xfc] sm:$0xf]
  %v105 = vld [vmem:[%s1 + $0x100] sm:$0xf]
  %v106 = vld [vmem:[%s1 + $0x104] sm:$0xf]
  %v107 = vld [vmem:[%s1 + $0x108] sm:$0xf]
  %v108 = vld [vmem:[%s1 + $0x10c] sm:$0xf]
  %v109 = vld [vmem:[%s1 + $0x110] sm:$0xf]
  %v110 = vld [vmem:[%s1 + $0x114] sm:$0xf]
  %v111 = vld [vmem:[%s1 + $0x118] sm:$0xf]
  %v112 = vld [vmem:[%s1 + $0x11c] sm:$0xf]
  %v113 = vld [vmem:[%s1 + $0x120] sm:$0xf]
  %v114 = vld [vmem:[%s1 + $0x124] sm:$0xf]
  %v115 = vld [vmem:[%s1 + $0x128] sm:$0xf]
  %v116 = vld [vmem:[%s1 + $0x12c] sm:$0xf]
  %v117 = vld [vmem:[%s1 + $0x130] sm:$0xf]
  %v118 = vld [vmem:[%s1 + $0x134] sm:$0xf]
  %v119 = vld [vmem:[%s1 + $0x138] sm:$0xf]
  %v120 = vld [vmem:[%s1 + $0x13c] sm:$0xf]
  %v121 = vld [vmem:[%s1 + $0x140] sm:$0xf]
  %v122 = vld [vmem:[%s1 + $0x144] sm:$0xf]
  %v123 = vld [vmem:[%s1 + $0x148] sm:$0xf]
  %v124 = vld [vmem:[%s1 + $0x14c] sm:$0xf]
  %v125 = vld [vmem:[%s1 + $0x150] sm:$0xf]
  %v126 = vld [vmem:[%s1 + $0x154] sm:$0xf]
  %v127 = vld [vmem:[%s1 + $0x158] sm:$0xf]
  %v128 = vld [vmem:[%s1 + $0x15c] sm:$0xf]
  %v129 = vld [vmem:[%s1 + $0x160] sm:$0xf]
  %v130 = vld [vmem:[%s1 + $0x164] sm:$0xf]
  %v131 = vld [vmem:[%s1 + $0x168] sm:$0xf]
  %v132 = vld [vmem:[%s1 + $0x16c] sm:$0xf]
  %v133 = vld [vmem:[%s1 + $0x170] sm:$0xf]
  %v134 = vld [vmem:[%s1 + $0x174] sm:$0xf]
  %v135 = vld [vmem:[%s1 + $0x178] sm:$0xf]
  %v136 = vld [vmem:[%s1 + $0x17c] sm:$0xf]
  %v137 = vld [vmem:[%s1 + $0x180] sm:$0xf]
  %v138 = vld [vmem:[%s1 + $0x184] sm:$0xf]
  %v139 = vld [vmem:[%s1 + $0x188] sm:$0xf]
  %v140 = vld [vmem:[%s1 + $0x18c] sm:$0xf]
  %v141 = vld [vmem:[%s1 + $0x190] sm:$0xf]
  %v142 = vld [vmem:[%s1 + $0x194] sm:$0xf]
  %v143 = vld [vmem:[%s1 + $0x198] sm:$0xf]
  %v144 = vld [vmem:[%s1 + $0x19c] sm:$0xf]
  %v145 = vld [vmem:[%s1 + $0x1a0] sm:$0xf]
  %v146 = vld [vmem:[%s1 + $0x1a4] sm:$0xf]
  %v147 = vld [vmem:[%s1 + $0x1a8] sm:$0xf]
  %v148 = vld [vmem:[%s1 + $0x1ac] sm:$0xf]
  %v149 = vld [vmem:[%s1 + $0x1b0] sm:$0xf]
  %v150 = vld [vmem:[%s1 + $0x1b4] sm:$0xf]
  %v151 = vld [vmem:[%s1 + $0x1b8] sm:$0xf]
  %v152 = vld [vmem:[%s1 + $0x1bc] sm:$0xf]
  %v153 = vld [vmem:[%s1 + $0x1c0] sm:$0xf]
  %v154 = vld [vmem:[%s1 + $0x1c4] sm:$0xf]
  %v155 = vld [vmem:[%s1 + $0x1c8] sm:$0xf]
  %v156 = vld [vmem:[%s1 + $0x1cc] sm:$0xf]
  %v157 = vld [vmem:[%s1 + $0x1d0] sm:$0xf]
  %v158 = vld [vmem:[%s1 + $0x1d4] sm:$0xf]
  %v159 = vld [vmem:[%s1 + $0x1d8] sm:$0xf]
  %v160 = vld [vmem:[%s1 + $0x1dc] sm:$0xf]
  %v161 = vld [vmem:[%s1 + $0x1e0] sm:$0xf]
  %v162 = vld [vmem:[%s1 + $0x1e4] sm:$0xf]
  %v163 = vld [vmem:[%s1 + $0x1e8] sm:$0xf]
  %v164 = vld [vmem:[%s1 + $0x1ec] sm:$0xf]
  %v165 = vld [vmem:[%s1 + $0x1f0] sm:$0xf]
  %v166 = vld [vmem:[%s1 + $0x1f4] sm:$0xf]
  %v167 = vld [vmem:[%s1 + $0x1f8] sm:$0xf]
  %v168 = vld [vmem:[%s1 + $0x1fc] sm:$0xf]
  %v169 = vunpack.c.l.bf16 %v41
  %v170 = vunpack.c.l.bf16 %v42
  %v171 = vunpack.c.l.bf16 %v43
  %v172 = vunpack.c.l.bf16 %v44
  %v173 = vunpack.c.l.bf16 %v45
  %v174 = vunpack.c.l.bf16 %v46
  %v175 = vunpack.c.l.bf16 %v47
  %v176 = vunpack.c.l.bf16 %v48
  %v177 = vunpack.c.l.bf16 %v49
  %v178 = vunpack.c.l.bf16 %v50
  %v179 = vunpack.c.l.bf16 %v51
  %v180 = vunpack.c.l.bf16 %v52
  %v181 = vunpack.c.l.bf16 %v53
  %v182 = vunpack.c.l.bf16 %v54
  %v183 = vunpack.c.l.bf16 %v55
  %v184 = vunpack.c.l.bf16 %v56
  %v185 = vunpack.c.l.bf16 %v57
  %v186 = vunpack.c.l.bf16 %v58
  %v187 = vunpack.c.l.bf16 %v59
  %v188 = vunpack.c.l.bf16 %v60
  %v189 = vunpack.c.l.bf16 %v61
  %v190 = vunpack.c.l.bf16 %v62
  %v191 = vunpack.c.l.bf16 %v63
  %v192 = vunpack.c.l.bf16 %v64
  %v193 = vunpack.c.l.bf16 %v65
  %v194 = vunpack.c.l.bf16 %v66
  %v195 = vunpack.c.l.bf16 %v67
  %v196 = vunpack.c.l.bf16 %v68
  %v197 = vunpack.c.l.bf16 %v69
  %v198 = vunpack.c.l.bf16 %v70
  %v199 = vunpack.c.l.bf16 %v71
  %v200 = vunpack.c.l.bf16 %v72
  %v201 = vunpack.c.l.bf16 %v73
  %v202 = vunpack.c.l.bf16 %v74
  %v203 = vunpack.c.l.bf16 %v75
  %v204 = vunpack.c.l.bf16 %v76
  %v205 = vunpack.c.l.bf16 %v77
  %v206 = vunpack.c.l.bf16 %v78
  %v207 = vunpack.c.l.bf16 %v79
  %v208 = vunpack.c.l.bf16 %v80
  %v209 = vunpack.c.l.bf16 %v81
  %v210 = vunpack.c.l.bf16 %v82
  %v211 = vunpack.c.l.bf16 %v83
  %v212 = vunpack.c.l.bf16 %v84
  %v213 = vunpack.c.l.bf16 %v85
  %v214 = vunpack.c.l.bf16 %v86
  %v215 = vunpack.c.l.bf16 %v87
  %v216 = vunpack.c.l.bf16 %v88
  %v217 = vunpack.c.l.bf16 %v89
  %v218 = vunpack.c.l.bf16 %v90
  %v219 = vunpack.c.l.bf16 %v91
  %v220 = vunpack.c.l.bf16 %v92
  %v221 = vunpack.c.l.bf16 %v93
  %v222 = vunpack.c.l.bf16 %v94
  %v223 = vunpack.c.l.bf16 %v95
  %v224 = vunpack.c.l.bf16 %v96
  %v225 = vunpack.c.l.bf16 %v97
  %v226 = vunpack.c.l.bf16 %v98
  %v227 = vunpack.c.l.bf16 %v99
  %v228 = vunpack.c.l.bf16 %v100
  %v229 = vunpack.c.l.bf16 %v101
  %v230 = vunpack.c.l.bf16 %v102
  %v231 = vunpack.c.l.bf16 %v103
  %v232 = vunpack.c.l.bf16 %v104
  %v233 = vunpack.c.l.bf16 %v105
  %v234 = vunpack.c.l.bf16 %v106
  %v235 = vunpack.c.l.bf16 %v107
  %v236 = vunpack.c.l.bf16 %v108
  %v237 = vunpack.c.l.bf16 %v109
  %v238 = vunpack.c.l.bf16 %v110
  %v239 = vunpack.c.l.bf16 %v111
  %v240 = vunpack.c.l.bf16 %v112
  %v241 = vunpack.c.l.bf16 %v113
  %v242 = vunpack.c.l.bf16 %v114
  %v243 = vunpack.c.l.bf16 %v115
  %v244 = vunpack.c.l.bf16 %v116
  %v245 = vunpack.c.l.bf16 %v117
  %v246 = vunpack.c.l.bf16 %v118
  %v247 = vunpack.c.l.bf16 %v119
  %v248 = vunpack.c.l.bf16 %v120
  %v249 = vunpack.c.l.bf16 %v121
  %v250 = vunpack.c.l.bf16 %v122
  %v251 = vunpack.c.l.bf16 %v123
  %v252 = vunpack.c.l.bf16 %v124
  %v253 = vunpack.c.l.bf16 %v125
  %v254 = vunpack.c.l.bf16 %v126
  %v255 = vunpack.c.l.bf16 %v127
  %v256 = vunpack.c.l.bf16 %v128
  %v257 = vunpack.c.l.bf16 %v129
  %v258 = vunpack.c.l.bf16 %v130
  %v259 = vunpack.c.l.bf16 %v131
  %v260 = vunpack.c.l.bf16 %v132
  %v261 = vunpack.c.l.bf16 %v133
  %v262 = vunpack.c.l.bf16 %v134
  %v263 = vunpack.c.l.bf16 %v135
  %v264 = vunpack.c.l.bf16 %v136
  %v265 = vunpack.c.l.bf16 %v137
  %v266 = vunpack.c.l.bf16 %v138
  %v267 = vunpack.c.l.bf16 %v139
  %v268 = vunpack.c.l.bf16 %v140
  %v269 = vunpack.c.l.bf16 %v141
  %v270 = vunpack.c.l.bf16 %v142
  %v271 = vunpack.c.l.bf16 %v143
  %v272 = vunpack.c.l.bf16 %v144
  %v273 = vunpack.c.l.bf16 %v145
  %v274 = vunpack.c.l.bf16 %v146
  %v275 = vunpack.c.l.bf16 %v147
  %v276 = vunpack.c.l.bf16 %v148
  %v277 = vunpack.c.l.bf16 %v149
  %v278 = vunpack.c.l.bf16 %v150
  %v279 = vunpack.c.l.bf16 %v151
  %v280 = vunpack.c.l.bf16 %v152
  %v281 = vunpack.c.l.bf16 %v153
  %v282 = vunpack.c.l.bf16 %v154
  %v283 = vunpack.c.l.bf16 %v155
  %v284 = vunpack.c.l.bf16 %v156
  %v285 = vunpack.c.l.bf16 %v157
  %v286 = vunpack.c.l.bf16 %v158
  %v287 = vunpack.c.l.bf16 %v159
  %v288 = vunpack.c.l.bf16 %v160
  %v289 = vunpack.c.l.bf16 %v161
  %v290 = vunpack.c.l.bf16 %v162
  %v291 = vunpack.c.l.bf16 %v163
  %v292 = vunpack.c.l.bf16 %v164
  %v293 = vunpack.c.l.bf16 %v165
  %v294 = vunpack.c.l.bf16 %v166
  %v295 = vunpack.c.l.bf16 %v167
  %v296 = vunpack.c.l.bf16 %v168
  %297 = vmatprep.subr.mxu0 0.0
  %298 = vmatpush1.msra.mxu0 %v184
  %299 = vmatprep.subr.mxu0 0.0
  %300 = vmatpush1.msra.mxu0 %v183
  %301 = vmatprep.subr.mxu0 0.0
  %302 = vmatpush1.msra.mxu0 %v182
  %303 = vmatprep.subr.mxu0 0.0
  %304 = vmatpush1.msra.mxu0 %v181
  %305 = vmatprep.subr.mxu0 0.0
  %306 = vmatpush1.msra.mxu0 %v180
  %307 = vmatprep.subr.mxu0 0.0
  %308 = vmatpush1.msra.mxu0 %v179
  %309 = vmatprep.subr.mxu0 0.0
  %310 = vmatpush1.msra.mxu0 %v178
  %311 = vmatprep.subr.mxu0 0.0
  %312 = vmatpush1.msra.mxu0 %v177
  %313 = vmatprep.subr.mxu0 0.0
  %314 = vmatpush1.msra.mxu0 %v176
  %315 = vmatprep.subr.mxu0 0.0
  %316 = vmatpush1.msra.mxu0 %v175
  %317 = vmatprep.subr.mxu0 0.0
  %318 = vmatpush1.msra.mxu0 %v174
  %319 = vmatprep.subr.mxu0 0.0
  %320 = vmatpush1.msra.mxu0 %v173
  %321 = vmatprep.subr.mxu0 0.0
  %322 = vmatpush1.msra.mxu0 %v172
  %323 = vmatprep.subr.mxu0 0.0
  %324 = vmatpush1.msra.mxu0 %v171
  %325 = vmatprep.subr.mxu0 0.0
  %326 = vmatpush1.msra.mxu0 %v170
  %327 = vmatprep.subr.mxu0 0.0
  %328 = vmatpush1.msra.mxu0 %v169
  %329 = vmatprep.subr.mxu0 0.0
  %330 = vmatpush2.msra.mxu0 %v200
  %331 = vmatprep.subr.mxu0 0.0
  %332 = vmatpush2.msra.mxu0 %v199
  %333 = vmatprep.subr.mxu0 0.0
  %334 = vmatpush2.msra.mxu0 %v198
  %335 = vmatprep.subr.mxu0 0.0
  %336 = vmatpush2.msra.mxu0 %v197
  %337 = vmatprep.subr.mxu0 0.0
  %338 = vmatpush2.msra.mxu0 %v196
  %339 = vmatprep.subr.mxu0 0.0
  %340 = vmatpush2.msra.mxu0 %v195
  %341 = vmatprep.subr.mxu0 0.0
  %342 = vmatpush2.msra.mxu0 %v194
  %343 = vmatprep.subr.mxu0 0.0
  %344 = vmatpush2.msra.mxu0 %v193
  %345 = vmatprep.subr.mxu0 0.0
  %346 = vmatpush2.msra.mxu0 %v192
  %347 = vmatprep.subr.mxu0 0.0
  %348 = vmatpush2.msra.mxu0 %v191
  %349 = vmatprep.subr.mxu0 0.0
  %350 = vmatpush2.msra.mxu0 %v190
  %351 = vmatprep.subr.mxu0 0.0
  %352 = vmatpush2.msra.mxu0 %v189
  %353 = vmatprep.subr.mxu0 0.0
  %354 = vmatpush2.msra.mxu0 %v188
  %355 = vmatprep.subr.mxu0 0.0
  %356 = vmatpush2.msra.mxu0 %v187
  %357 = vmatprep.subr.mxu0 0.0
  %358 = vmatpush2.msra.mxu0 %v186
  %359 = vmatprep.subr.mxu0 0.0
  %360 = vmatpush2.msra.mxu0 %v185
  %361 = vmatprep.mubr.f32.mxu0 %v15
  %362 = vmatmul.mubr.f32.gmra.mxu0 %v14
  %v363 = vpop.f32.mrf.mxu0
  %v364 = vadd.f32 0.0, %v363
  %v365 = vpop.f32.mrf.mxu0
  %366 = vdwg.mxu0
  %367 = vmatprep.subr.mxu0 0.0
  %368 = vmatpush1.msra.mxu0 %v216
  %369 = vmatprep.subr.mxu0 0.0
  %370 = vmatpush1.msra.mxu0 %v215
  %371 = vmatprep.subr.mxu0 0.0
  %372 = vmatpush1.msra.mxu0 %v214
  %373 = vmatprep.subr.mxu0 0.0
  %374 = vmatpush1.msra.mxu0 %v213
  %375 = vmatprep.subr.mxu0 0.0
  %376 = vmatpush1.msra.mxu0 %v212
  %377 = vmatprep.subr.mxu0 0.0
  %378 = vmatpush1.msra.mxu0 %v211
  %379 = vmatprep.subr.mxu0 0.0
  %380 = vmatpush1.msra.mxu0 %v210
  %381 = vmatprep.subr.mxu0 0.0
  %382 = vmatpush1.msra.mxu0 %v209
  %383 = vmatprep.subr.mxu0 0.0
  %384 = vmatpush1.msra.mxu0 %v208
  %385 = vmatprep.subr.mxu0 0.0
  %386 = vmatpush1.msra.mxu0 %v207
  %387 = vmatprep.subr.mxu0 0.0
  %388 = vmatpush1.msra.mxu0 %v206
  %389 = vmatprep.subr.mxu0 0.0
  %390 = vmatpush1.msra.mxu0 %v205
  %391 = vmatprep.subr.mxu0 0.0
  %392 = vmatpush1.msra.mxu0 %v204
  %393 = vmatprep.subr.mxu0 0.0
  %394 = vmatpush1.msra.mxu0 %v203
  %395 = vmatprep.subr.mxu0 0.0
  %396 = vmatpush1.msra.mxu0 %v202
  %397 = vmatprep.subr.mxu0 0.0
  %398 = vmatpush1.msra.mxu0 %v201
  %399 = vmatprep.subr.mxu0 0.0
  %400 = vmatpush2.msra.mxu0 %v232
  %401 = vmatprep.subr.mxu0 0.0
  %402 = vmatpush2.msra.mxu0 %v231
  %403 = vmatprep.subr.mxu0 0.0
  %404 = vmatpush2.msra.mxu0 %v230
  %405 = vmatprep.subr.mxu0 0.0
  %406 = vmatpush2.msra.mxu0 %v229
  %407 = vmatprep.subr.mxu0 0.0
  %408 = vmatpush2.msra.mxu0 %v228
  %409 = vmatprep.subr.mxu0 0.0
  %410 = vmatpush2.msra.mxu0 %v227
  %411 = vmatprep.subr.mxu0 0.0
  %412 = vmatpush2.msra.mxu0 %v226
  %413 = vmatprep.subr.mxu0 0.0
  %414 = vmatpush2.msra.mxu0 %v225
  %415 = vmatprep.subr.mxu0 0.0
  %416 = vmatpush2.msra.mxu0 %v224
  %417 = vmatprep.subr.mxu0 0.0
  %418 = vmatpush2.msra.mxu0 %v223
  %419 = vmatprep.subr.mxu0 0.0
  %420 = vmatpush2.msra.mxu0 %v222
  %421 = vmatprep.subr.mxu0 0.0
  %422 = vmatpush2.msra.mxu0 %v221
  %423 = vmatprep.subr.mxu0 0.0
  %424 = vmatpush2.msra.mxu0 %v220
  %425 = vmatprep.subr.mxu0 0.0
  %426 = vmatpush2.msra.mxu0 %v219
  %427 = vmatprep.subr.mxu0 0.0
  %428 = vmatpush2.msra.mxu0 %v218
  %429 = vmatprep.subr.mxu0 0.0
  %430 = vmatpush2.msra.mxu0 %v217
  %431 = vmatprep.mubr.f32.mxu0 %v17
  %432 = vmatmul.mubr.f32.gmra.mxu0 %v16
  %v433 = vpop.f32.mrf.mxu0
  %v434 = vadd.f32 %v364, %v433
  %v435 = vpop.f32.mrf.mxu0
  %436 = vdwg.mxu0
  %437 = vmatprep.subr.mxu0 0.0
  %438 = vmatpush1.msra.mxu0 %v248
  %439 = vmatprep.subr.mxu0 0.0
  %440 = vmatpush1.msra.mxu0 %v247
  %441 = vmatprep.subr.mxu0 0.0
  %442 = vmatpush1.msra.mxu0 %v246
  %443 = vmatprep.subr.mxu0 0.0
  %444 = vmatpush1.msra.mxu0 %v245
  %445 = vmatprep.subr.mxu0 0.0
  %446 = vmatpush1.msra.mxu0 %v244
  %447 = vmatprep.subr.mxu0 0.0
  %448 = vmatpush1.msra.mxu0 %v243
  %449 = vmatprep.subr.mxu0 0.0
  %450 = vmatpush1.msra.mxu0 %v242
  %451 = vmatprep.subr.mxu0 0.0
  %452 = vmatpush1.msra.mxu0 %v241
  %453 = vmatprep.subr.mxu0 0.0
  %454 = vmatpush1.msra.mxu0 %v240
  %455 = vmatprep.subr.mxu0 0.0
  %456 = vmatpush1.msra.mxu0 %v239
  %457 = vmatprep.subr.mxu0 0.0
  %458 = vmatpush1.msra.mxu0 %v238
  %459 = vmatprep.subr.mxu0 0.0
  %460 = vmatpush1.msra.mxu0 %v237
  %461 = vmatprep.subr.mxu0 0.0
  %462 = vmatpush1.msra.mxu0 %v236
  %463 = vmatprep.subr.mxu0 0.0
  %464 = vmatpush1.msra.mxu0 %v235
  %465 = vmatprep.subr.mxu0 0.0
  %466 = vmatpush1.msra.mxu0 %v234
  %467 = vmatprep.subr.mxu0 0.0
  %468 = vmatpush1.msra.mxu0 %v233
  %469 = vmatprep.subr.mxu0 0.0
  %470 = vmatpush2.msra.mxu0 %v264
  %471 = vmatprep.subr.mxu0 0.0
  %472 = vmatpush2.msra.mxu0 %v263
  %473 = vmatprep.subr.mxu0 0.0
  %474 = vmatpush2.msra.mxu0 %v262
  %475 = vmatprep.subr.mxu0 0.0
  %476 = vmatpush2.msra.mxu0 %v261
  %477 = vmatprep.subr.mxu0 0.0
  %478 = vmatpush2.msra.mxu0 %v260
  %479 = vmatprep.subr.mxu0 0.0
  %480 = vmatpush2.msra.mxu0 %v259
  %481 = vmatprep.subr.mxu0 0.0
  %482 = vmatpush2.msra.mxu0 %v258
  %483 = vmatprep.subr.mxu0 0.0
  %484 = vmatpush2.msra.mxu0 %v257
  %485 = vmatprep.subr.mxu0 0.0
  %486 = vmatpush2.msra.mxu0 %v256
  %487 = vmatprep.subr.mxu0 0.0
  %488 = vmatpush2.msra.mxu0 %v255
  %489 = vmatprep.subr.mxu0 0.0
  %490 = vmatpush2.msra.mxu0 %v254
  %491 = vmatprep.subr.mxu0 0.0
  %492 = vmatpush2.msra.mxu0 %v253
  %493 = vmatprep.subr.mxu0 0.0
  %494 = vmatpush2.msra.mxu0 %v252
  %495 = vmatprep.subr.mxu0 0.0
  %496 = vmatpush2.msra.mxu0 %v251
  %497 = vmatprep.subr.mxu0 0.0
  %498 = vmatpush2.msra.mxu0 %v250
  %499 = vmatprep.subr.mxu0 0.0
  %500 = vmatpush2.msra.mxu0 %v249
  %501 = vmatprep.mubr.f32.mxu0 %v19
  %502 = vmatmul.mubr.f32.gmra.mxu0 %v18
  %v503 = vpop.f32.mrf.mxu0
  %v504 = vadd.f32 %v434, %v503
  %v505 = vpop.f32.mrf.mxu0
  %506 = vdwg.mxu0
  %507 = vmatprep.subr.mxu0 0.0
  %508 = vmatpush1.msra.mxu0 %v280
  %509 = vmatprep.subr.mxu0 0.0
  %510 = vmatpush1.msra.mxu0 %v279
  %511 = vmatprep.subr.mxu0 0.0
  %512 = vmatpush1.msra.mxu0 %v278
  %513 = vmatprep.subr.mxu0 0.0
  %514 = vmatpush1.msra.mxu0 %v277
  %515 = vmatprep.subr.mxu0 0.0
  %516 = vmatpush1.msra.mxu0 %v276
  %517 = vmatprep.subr.mxu0 0.0
  %518 = vmatpush1.msra.mxu0 %v275
  %519 = vmatprep.subr.mxu0 0.0
  %520 = vmatpush1.msra.mxu0 %v274
  %521 = vmatprep.subr.mxu0 0.0
  %522 = vmatpush1.msra.mxu0 %v273
  %523 = vmatprep.subr.mxu0 0.0
  %524 = vmatpush1.msra.mxu0 %v272
  %525 = vmatprep.subr.mxu0 0.0
  %526 = vmatpush1.msra.mxu0 %v271
  %527 = vmatprep.subr.mxu0 0.0
  %528 = vmatpush1.msra.mxu0 %v270
  %529 = vmatprep.subr.mxu0 0.0
  %530 = vmatpush1.msra.mxu0 %v269
  %531 = vmatprep.subr.mxu0 0.0
  %532 = vmatpush1.msra.mxu0 %v268
  %533 = vmatprep.subr.mxu0 0.0
  %534 = vmatpush1.msra.mxu0 %v267
  %535 = vmatprep.subr.mxu0 0.0
  %536 = vmatpush1.msra.mxu0 %v266
  %537 = vmatprep.subr.mxu0 0.0
  %538 = vmatpush1.msra.mxu0 %v265
  %539 = vmatprep.subr.mxu0 0.0
  %540 = vmatpush2.msra.mxu0 %v296
  %541 = vmatprep.subr.mxu0 0.0
  %542 = vmatpush2.msra.mxu0 %v295
  %543 = vmatprep.subr.mxu0 0.0
  %544 = vmatpush2.msra.mxu0 %v294
  %545 = vmatprep.subr.mxu0 0.0
  %546 = vmatpush2.msra.mxu0 %v293
  %547 = vmatprep.subr.mxu0 0.0
  %548 = vmatpush2.msra.mxu0 %v292
  %549 = vmatprep.subr.mxu0 0.0
  %550 = vmatpush2.msra.mxu0 %v291
  %551 = vmatprep.subr.mxu0 0.0
  %552 = vmatpush2.msra.mxu0 %v290
  %553 = vmatprep.subr.mxu0 0.0
  %554 = vmatpush2.msra.mxu0 %v289
  %555 = vmatprep.subr.mxu0 0.0
  %556 = vmatpush2.msra.mxu0 %v288
  %557 = vmatprep.subr.mxu0 0.0
  %558 = vmatpush2.msra.mxu0 %v287
  %559 = vmatprep.subr.mxu0 0.0
  %560 = vmatpush2.msra.mxu0 %v286
  %561 = vmatprep.subr.mxu0 0.0
  %562 = vmatpush2.msra.mxu0 %v285
  %563 = vmatprep.subr.mxu0 0.0
  %564 = vmatpush2.msra.mxu0 %v284
  %565 = vmatprep.subr.mxu0 0.0
  %566 = vmatpush2.msra.mxu0 %v283
  %567 = vmatprep.subr.mxu0 0.0
  %568 = vmatpush2.msra.mxu0 %v282
  %569 = vmatprep.subr.mxu0 0.0
  %570 = vmatpush2.msra.mxu0 %v281
  %571 = vmatprep.mubr.f32.mxu0 %v21
  %572 = vmatmul.mubr.f32.gmra.mxu0 %v20
  %v573 = vpop.f32.mrf.mxu0
  %v574 = vadd.f32 %v504, %v573
  %v575 = vpop.f32.mrf.mxu0
  %576 = vdwg.mxu0
  %v577 = vmul.f32 %v574, %v40
  %v578 = vld [vmem:[%s2] sm:$0x1]
  %v580 = vlaneseq
  %v581 = vshrl.u32 %v580, 7
  %v582 = vsub.s32 0, %v581
  %v583 = vrot.slane %v578, %v582
  %v585 = vadd.f32 %v577, %v583
  %v586 = vmul.f32 %v585, %v585
  %vm587 = vcmask 416768
  %v588 = vsel %vm587, %v586, 0.0
  %589 = vadd.xlane.f32.xlu0 %v588
  %v590 = vpop.xlane.xlu0 %589
  %v591 = vadd.f32 %v590, 1e-12
  %v592 = vrsqrt.pop %v591
  %v593 = vmul.f32 %v585, %v592
  %594 = vst.msk [vmem:[%s3] sm:$0xff] %vm587, %v593
  // Predicated region
  $region14: #{encoder_image_forward.1} parent=0 // pred_check
    _
  $region15: #{encoder_image_forward.1} parent=0 // pred_check_branch
    %596 = sbr.rel (0) target = $region17
  $region16: #{encoder_image_forward.1} parent=0 // pred_region
    _
  $region17: #{encoder_image_forward.1} parent=0 // pred_fallthru
    _
  // Predicated region
  $region18: #{encoder_image_forward.1} parent=0 // pred_check
    _
  $region19: #{encoder_image_forward.1} parent=0 // pred_check_branch
    %598 = sbr.rel (0) target = $region21
  $region20: #{encoder_image_forward.1} parent=0 // pred_region
    _
  $region21: #{encoder_image_forward.1} parent=0 // pred_fallthru
    _

</llo_original>
